<compile_context>
chip_gen: v7x
topology: tpu7x:2x2x1
jax: 0.10.0
libtpu: 0.0.40
codegen_flags: <defaults>
</compile_context>

<pallas_src>
import functools

import jax
import jax.numpy as jnp
from jax import lax
from jax.experimental import pallas as pl
from jax.experimental.pallas import tpu as pltpu


def _round_up(n, m):
    return ((n + m - 1) // m) * m


def _patch_embed_kernel(p_ref, w_ref, b_ref, o_ref):
    """One (image, column-tile) step: (E, K) @ (K, tn) -> f32, + bias, cast."""
    acc = jnp.dot(w_ref[...], p_ref[...], preferred_element_type=jnp.float32)
    o_ref[...] = (acc + b_ref[...]).astype(o_ref.dtype)


@functools.partial(
    jax.jit,
    static_argnames=("patch_size", "compute_dtype", "tile_budget_bytes"),
)
def patch_embed(
    x,
    weight,
    bias,
    *,
    patch_size=(4, 4),
    compute_dtype=jnp.bfloat16,          # set jnp.float32 for full f32 parity
    tile_budget_bytes=12 * 1024 * 1024,  # per-step pipelined tiles; safe on v5e/v6e/v7x
):
    """PatchEmbed forward.

    x:      [B, C, H, W]     (NCHW, like PyTorch)
    weight: [E, C, ph, pw]   (Conv2d weight layout)
    bias:   [E]
    returns [B, E, Hp, Wp]   (dtype follows x.dtype, like the f32 module)
    """
    B, C, H, W = x.shape
    E = weight.shape[0]
    ph, pw = patch_size

    # F.pad semantics: zero-pad W then H up to multiples of the patch size.
    pad_h = (-H) % ph
    pad_w = (-W) % pw
    if pad_h or pad_w:
        x = jnp.pad(x, ((0, 0), (0, 0), (0, pad_h), (0, pad_w)))
    H2, W2 = H + pad_h, W + pad_w
    Hp, Wp = H2 // ph, W2 // pw
    N = Hp * Wp
    K = C * ph * pw

    out_dtype = x.dtype
    out_bytes = jnp.dtype(out_dtype).itemsize
    cd_bytes = jnp.dtype(compute_dtype).itemsize

    # Patch gather -> [B, K, N], K ordered (C, ph, pw) to match the flattened
    # Conv2d weight, patch index N on the lane axis.  Single XLA cast+transpose
    # pass; because the kernel already emits [B, E, N], there is no epilogue
    # transpose pass afterwards (only a free reshape).
    patches = (
        x.astype(compute_dtype)
        .reshape(B, C, Hp, ph, Wp, pw)
        .transpose(0, 1, 3, 5, 2, 4)     # (B, C, ph, pw, Hp, Wp)
        .reshape(B, K, N)
    )

    wmat = weight.reshape(E, K).astype(compute_dtype)   # native Conv2d flatten
    bias_col = bias.reshape(E, 1).astype(jnp.float32)

    # ---- Column-tile (tn) selection from a VMEM budget -------------------
    # Double-buffered per-step tiles: patches (K, tn) + output (E, tn);
    # grid-invariant weight (E, K) and bias (E, 1 -> 128-lane padded) are
    # also counted twice (pipeline double-buffers them too).
    fixed = 2 * E * K * cd_bytes + 2 * _round_up(E, 8) * 128 * 4
    bytes_per_col = 2 * (K * cd_bytes + E * out_bytes)
    avail = max(tile_budget_bytes - fixed, bytes_per_col * 128)
    tn_cap = max(avail // bytes_per_col, 128)
    tn_cap_aligned = max(tn_cap // 128, 1) * 128

    if N <= tn_cap:
        nt, tn = 1, N                    # full-dim block: no lane padding needed
    else:
        nt = -(-N // tn_cap_aligned)     # balance tiles, 128-aligned
        tn = _round_up(-(-N // nt), 128)
    if B == 1 and nt == 1 and N >= 256 and N % 256 == 0:
        nt, tn = 2, N // 2               # keep grid >= 2 steps for v7x's 2 cores
    Np = nt * tn
    if Np != N:
        patches = jnp.pad(patches, ((0, 0), (0, 0), (0, Np - N)))

    cost = pl.CostEstimate(
        flops=2 * B * Np * K * E,
        transcendentals=0,
        bytes_accessed=(B * K * Np * cd_bytes + E * K * cd_bytes + E * 4
                        + B * E * Np * out_bytes),
    )

    out = pl.pallas_call(
        _patch_embed_kernel,
        out_shape=jax.ShapeDtypeStruct((B, E, Np), out_dtype),
        grid_spec=pltpu.PrefetchScalarGridSpec(
            num_scalar_prefetch=0,
            grid=(B, nt),
            in_specs=[
                pl.BlockSpec((None, K, tn), lambda b, t: (b, 0, t)),  # patches
                pl.BlockSpec((E, K), lambda b, t: (0, 0)),            # weight
                pl.BlockSpec((E, 1), lambda b, t: (0, 0)),            # bias col
            ],
            out_specs=pl.BlockSpec((None, E, tn), lambda b, t: (b, 0, t)),
        ),
        compiler_params=pltpu.CompilerParams(
            dimension_semantics=("parallel", "parallel"),
            vmem_limit_bytes=32 * 1024 * 1024,   # raise v5e's 16 MiB scoped default
        ),
        cost_estimate=cost,
    )(patches, wmat, bias_col)

    if Np != N:
        out = out[:, :, :N]              # drop bias-filled padding columns
    return out.reshape(B, E, Hp, Wp)


def _reference(x, weight, bias, patch_size):
    """Pure-JAX f32 reference: strided conv (identical to nn.Conv2d forward)."""
    ph, pw = patch_size
    pad_h = (-x.shape[2]) % ph
    pad_w = (-x.shape[3]) % pw
    if pad_h or pad_w:
        x = jnp.pad(x, ((0, 0), (0, 0), (0, pad_h), (0, pad_w)))
    y = lax.conv_general_dilated(
        x, weight, window_strides=(ph, pw), padding="VALID",
        dimension_numbers=("NCHW", "OIHW", "NCHW"),
    )
    return y + bias.reshape(1, -1, 1, 1)


if __name__ == "__main__":
    # Small, deterministic config: patch_size=4, in_chans=4, embed_dim=32.
    B, C, H, W = 2, 4, 16, 16
    E = 32
    patch_size = (4, 4)

    key = jax.random.PRNGKey(0)
    kx, kw, kb = jax.random.split(key, 3)
    x = jax.random.normal(kx, (B, C, H, W), dtype=jnp.float32)
    weight = jax.random.normal(kw, (E, C, patch_size[0], patch_size[1]),
                               dtype=jnp.float32) * 0.02
    bias = jax.random.normal(kb, (E,), dtype=jnp.float32) * 0.02

    # Case 1: divisible spatial dims, single column tile per image.
    out = jax.block_until_ready(patch_embed(x, weight, bias, patch_size=patch_size))
    ref = _reference(x, weight, bias, patch_size)
    assert out.shape == (B, E, H // patch_size[0], W // patch_size[1]), out.shape
    assert out.dtype == x.dtype, out.dtype
    # bf16 MXU operands (f32 accumulation) -> tolerance loosened vs pure-f32.
    assert jnp.allclose(out, ref, atol=2e-2, rtol=2e-2), "mismatch vs reference"

    # Case 2: exercises the H/W zero-padding path (non-divisible spatial dims).
    x2 = jax.random.normal(kx, (B, C, 18, 19), dtype=jnp.float32)
    out2 = jax.block_until_ready(
        patch_embed(x2, weight, bias, patch_size=patch_size))
    ref2 = _reference(x2, weight, bias, patch_size)
    assert out2.shape == ref2.shape, (out2.shape, ref2.shape)
    assert jnp.allclose(out2, ref2, atol=2e-2, rtol=2e-2), "mismatch (padded)"

    # Case 3: tiny VMEM budget forces the multi-tile (nt > 1) path with
    # 128-aligned column tiles and padded/sliced N (N = 17*17 = 289).
    x3 = jax.random.normal(kx, (B, C, 68, 68), dtype=jnp.float32)
    out3 = jax.block_until_ready(
        patch_embed(x3, weight, bias, patch_size=patch_size,
                    tile_budget_bytes=64 * 1024))
    ref3 = _reference(x3, weight, bias, patch_size)
    assert out3.shape == ref3.shape, (out3.shape, ref3.shape)
    assert jnp.allclose(out3, ref3, atol=2e-2, rtol=2e-2), "mismatch (multi-tile)"

    print("KERNEL_OK")
</pallas_src>

<mosaic_0001>
module attributes {stable_mosaic.version = 11 : i64} {
  func.func @_patch_embed_kernel(%arg0: i32, %arg1: i32, %arg2: memref<1x64x16xbf16, #tpu.memory_space<vmem>>, %arg3: memref<32x64xbf16, #tpu.memory_space<vmem>>, %arg4: memref<32x1xf32, #tpu.memory_space<vmem>>, %arg5: memref<1x32x16xf32, #tpu.memory_space<vmem>>) attributes {dimension_semantics = [#tpu.dimension_semantics<parallel>, #tpu.dimension_semantics<parallel>], iteration_bounds = array<i64: 2, 1>, scalar_prefetch = 0 : i64, scratch_operands = 0 : i64, tpu.core_type = #tpu.core_type<tc>, window_params = [{transform_indices = @transform_0, window_bounds = array<i64: 1, 64, 16>}, {pipeline_mode = #tpu.pipeline_mode<synchronous>, transform_indices = @transform_1, window_bounds = array<i64: 32, 64>}, {pipeline_mode = #tpu.pipeline_mode<synchronous>, transform_indices = @transform_2, window_bounds = array<i64: 32, 1>}, {transform_indices = @transform_3, window_bounds = array<i64: 1, 32, 16>}]} {
    %c0 = arith.constant 0 : index
    %c0_0 = arith.constant 0 : index
    %0 = vector.load %arg3[%c0, %c0_0] : memref<32x64xbf16, #tpu.memory_space<vmem>>, vector<32x64xbf16>
    %c0_1 = arith.constant 0 : index
    %c0_2 = arith.constant 0 : index
    %c0_3 = arith.constant 0 : index
    %1 = vector.load %arg2[%c0_1, %c0_2, %c0_3] : memref<1x64x16xbf16, #tpu.memory_space<vmem>>, vector<1x64x16xbf16>
    %2 = vector.shape_cast %1 : vector<1x64x16xbf16> to vector<64x16xbf16>
    %cst = arith.constant dense<0.000000e+00> : vector<32x16xf32>
    %3 = tpu.matmul %0, %2, %cst {dimension_numbers = #tpu.dot_dimension_numbers<[1], [0], [0], [1], [0, 0, 1, 1], [], []>} : vector<32x64xbf16>, vector<64x16xbf16>, vector<32x16xf32> -> vector<32x16xf32>
    %c0_4 = arith.constant 0 : index
    %c0_5 = arith.constant 0 : index
    %4 = vector.load %arg4[%c0_4, %c0_5] : memref<32x1xf32, #tpu.memory_space<vmem>>, vector<32x1xf32>
    %5 = vector.broadcast %4 : vector<32x1xf32> to vector<32x16xf32>
    %6 = arith.addf %3, %5 : vector<32x16xf32>
    %c0_6 = arith.constant 0 : index
    %c0_7 = arith.constant 0 : index
    %c0_8 = arith.constant 0 : index
    %7 = vector.load %arg5[%c0_6, %c0_7, %c0_8] : memref<1x32x16xf32, #tpu.memory_space<vmem>>, vector<1x32x16xf32>
    %8 = vector.shape_cast %7 : vector<1x32x16xf32> to vector<32x16xf32>
    %9 = vector.shape_cast %6 : vector<32x16xf32> to vector<1x32x16xf32>
    tpu.vector_store %arg5[%c0_6, %c0_7, %c0_8], %9 {strides = array<i32>} : memref<1x32x16xf32, #tpu.memory_space<vmem>>, vector<1x32x16xf32>,
    return
  }
  func.func @transform_0(%arg0: i32, %arg1: i32) -> (i32, i32, i32) {
    %c0_i32 = arith.constant 0 : i32
    %c0_i32_0 = arith.constant 0 : i32
    return %arg0, %c0_i32, %arg1 : i32, i32, i32
  }
  func.func @transform_1(%arg0: i32, %arg1: i32) -> (i32, i32) {
    %c0_i32 = arith.constant 0 : i32
    %c0_i32_0 = arith.constant 0 : i32
    %c0_i32_1 = arith.constant 0 : i32
    return %c0_i32, %c0_i32_0 : i32, i32
  }
  func.func @transform_2(%arg0: i32, %arg1: i32) -> (i32, i32) {
    %c0_i32 = arith.constant 0 : i32
    %c0_i32_0 = arith.constant 0 : i32
    %c0_i32_1 = arith.constant 0 : i32
    return %c0_i32, %c0_i32_0 : i32, i32
  }
  func.func @transform_3(%arg0: i32, %arg1: i32) -> (i32, i32, i32) {
    %c0_i32 = arith.constant 0 : i32
    %c0_i32_0 = arith.constant 0 : i32
    return %arg0, %c0_i32, %arg1 : i32, i32, i32
  }
}

</mosaic_0001>

<llo_original>
// kernel: patch_embed.1
$region0: #{patch_embed.1}
  #allocation0 [shape = 'u32[]', space=smem, size = 0x4, offset = 0x4, fixed_abs, tag = 'smem constant byte address 0x4 - core index']
  #allocation1 [shape = 'u32[144,128]{1,0:T(1,128)}', space=vmem, size = 0x12000, scoped, tag = 'internal scratch']
  %s0 = inlined_call_operand.vmem [shape: bf16[2,64,16], index: 0, kind: input, shape index: {}]
  %s1 = inlined_call_operand.vmem [shape: bf16[32,64], index: 1, kind: input, shape index: {}]
  %s2 = inlined_call_operand.vmem [shape: f32[32,1], index: 2, kind: input, shape index: {}]
  %s3 = inlined_call_operand.vmem [shape: f32[2,32,16], index: 3, kind: output, shape index: {}]
  %s4 = sld [smem:[#allocation0]]
  $region45: #{patch_embed.1} parent=0
    _
  %s6 = ssub.s32 1, %s4
  %s7 = scalar_select 0, %s6, %s4
  loop: start=0, step=1, limit=4
  $region2: #{patch_embed.1} parent=0 // loop_pre_header
    _
  $region3: #{patch_embed.1} parent=0 // loop_header
    %s9 = sphi 0, %s13
    %p10 = scmp.ge.s32.totalorder %s9, 4
    %s16 = sphi 0, %s28
    %s17 = sphi 0, %s24
    %s18 = sphi 0, %s16
    %s19 = sphi 0, %s17
    %s20 = sphi 0, %s18
    %s21 = sphi 0, %s19
    %s33 = sphi 0, %s35
    %s36 = sphi 0, %s33
    %s37 = sphi 0, %s36
    %s53 = sphi 0, %s37
    %s57 = sphi 0, %s57
    %s59 = sphi 0, %s57
    %s60 = sphi 0, %s59
    %s74 = sphi 0, %s60
    %s78 = sphi 0, %s78
    %s80 = sphi 0, %s78
    %s81 = sphi 0, %s80
    %s95 = sphi 0, %s81
    %s103 = sphi 0, %s105
    %s106 = sphi 0, %s103
    %s107 = sphi 0, %s106
    %s123 = sphi 0, %s107
  $region4: #{patch_embed.1} parent=0 // loop_header_branch
    %12 = sbr.rel (%p10) target = $region8
  $region5: #{patch_embed.1} parent=0 // loop_body
    %s14 = ssub.s32 %s9, 1
    %s15 = ssub.s32 %s9, 2
    %s22 = sadd.s32 1, %s17
    %p23 = scmp.ge.s32.totalorder %s22, 1
    %s24 = scalar_select %p23, 0, %s22
    %s25 = sadd.s32 1, %s16
    %s26 = scalar_select %p23, %s25, %s16
    %p27 = scmp.ge.s32.totalorder %s26, 2
    %s28 = scalar_select %p27, 0, %s26
    %s29 = ssub.s32 %s16, %s28
    %s30 = ssub.s32 %s17, %s24
    %s31 = sor.u32 %s29, %s30
    %p32 = scmp.eq.s32.totalorder %s31, 0
    %s34 = sadd.s32 %s33, 1
    %s35 = scalar_select %p32, %s33, %s34
    %p38 = pneg %p32
    %p39 = scmp.eq.s32.totalorder %s9, 1
    %p40 = por %p38, %p39
    %p41 = scmp.ne.s32.totalorder %s33, %s36
    %p42 = scmp.eq.s32.totalorder %s9, 0
    %p43 = por %p41, %p42
    %p44 = scmp.ne.s32.totalorder %s33, %s36
    %p45 = scmp.eq.s32.totalorder %s14, 1
    %p46 = por %p44, %p45
    %p47 = scmp.ne.s32.totalorder %s36, %s37
    %p48 = scmp.eq.s32.totalorder %s14, 0
    %p49 = por %p47, %p48
    %p50 = scmp.ne.s32.totalorder %s36, %s37
    %p51 = scmp.eq.s32.totalorder %s15, 1
    %p52 = por %p50, %p51
    %p54 = scmp.ne.s32.totalorder %s37, %s53
    %p55 = scmp.eq.s32.totalorder %s15, 0
    %p56 = por %p54, %p55
    %s58 = sadd.s32 %s57, 1
    %p61 = scmp.eq.s32.totalorder %s9, 1
    %p62 = scmp.ne.s32.totalorder %s57, %s59
    %p63 = scmp.eq.s32.totalorder %s9, 0
    %p64 = por %p62, %p63
    %p65 = scmp.ne.s32.totalorder %s57, %s59
    %p66 = scmp.eq.s32.totalorder %s14, 1
    %p67 = por %p65, %p66
    %p68 = scmp.ne.s32.totalorder %s59, %s60
    %p69 = scmp.eq.s32.totalorder %s14, 0
    %p70 = por %p68, %p69
    %p71 = scmp.ne.s32.totalorder %s59, %s60
    %p72 = scmp.eq.s32.totalorder %s15, 1
    %p73 = por %p71, %p72
    %p75 = scmp.ne.s32.totalorder %s60, %s74
    %p76 = scmp.eq.s32.totalorder %s15, 0
    %p77 = por %p75, %p76
    %s79 = sadd.s32 %s78, 1
    %p82 = scmp.eq.s32.totalorder %s9, 1
    %p83 = scmp.ne.s32.totalorder %s78, %s80
    %p84 = scmp.eq.s32.totalorder %s9, 0
    %p85 = por %p83, %p84
    %p86 = scmp.ne.s32.totalorder %s78, %s80
    %p87 = scmp.eq.s32.totalorder %s14, 1
    %p88 = por %p86, %p87
    %p89 = scmp.ne.s32.totalorder %s80, %s81
    %p90 = scmp.eq.s32.totalorder %s14, 0
    %p91 = por %p89, %p90
    %p92 = scmp.ne.s32.totalorder %s80, %s81
    %p93 = scmp.eq.s32.totalorder %s15, 1
    %p94 = por %p92, %p93
    %p96 = scmp.ne.s32.totalorder %s81, %s95
    %p97 = scmp.eq.s32.totalorder %s15, 0
    %p98 = por %p96, %p97
    %s99 = ssub.s32 %s16, %s28
    %s100 = ssub.s32 %s17, %s24
    %s101 = sor.u32 %s99, %s100
    %p102 = scmp.eq.s32.totalorder %s101, 0
    %s104 = sadd.s32 %s103, 1
    %s105 = scalar_select %p102, %s103, %s104
    %p108 = pneg %p102
    %p109 = scmp.eq.s32.totalorder %s9, 1
    %p110 = por %p108, %p109
    %p111 = scmp.ne.s32.totalorder %s103, %s106
    %p112 = scmp.eq.s32.totalorder %s9, 0
    %p113 = por %p111, %p112
    %p114 = scmp.ne.s32.totalorder %s103, %s106
    %p115 = scmp.eq.s32.totalorder %s14, 1
    %p116 = por %p114, %p115
    %p117 = scmp.ne.s32.totalorder %s106, %s107
    %p118 = scmp.eq.s32.totalorder %s14, 0
    %p119 = por %p117, %p118
    %p120 = scmp.ne.s32.totalorder %s106, %s107
    %p121 = scmp.eq.s32.totalorder %s15, 1
    %p122 = por %p120, %p121
    %p124 = scmp.ne.s32.totalorder %s107, %s123
    %p125 = scmp.eq.s32.totalorder %s15, 0
    %p126 = por %p124, %p125
    %p127 = scmp.le.s32.totalorder 1, %s9
    %p128 = scmp.lt.s32.totalorder %s9, 3
    %p129 = pnand %p127, %p128
    %p130 = pneg %p129
    // Predicated region
    $region9: #{patch_embed.1} parent=5 // pred_check
      _
    $region10: #{patch_embed.1} parent=5 // pred_check_branch
      %132 = sbr.rel (%p129) target = $region12
    $region11: #{patch_embed.1} parent=5 // pred_region
      %s133 = ssub.s32 %s9, 1
      // Predicated region
      $region13: #{patch_embed.1} parent=11 // pred_check
        %p134 = pneg %p70
      $region14: #{patch_embed.1} parent=11 // pred_check_branch
        %136 = sbr.rel (%p134) target = $region16
      $region15: #{patch_embed.1} parent=11 // pred_region
        _
      $region16: #{patch_embed.1} parent=11 // pred_fallthru
        _
      // Predicated region
      $region17: #{patch_embed.1} parent=11 // pred_check
        %p137 = pneg %p91
      $region18: #{patch_embed.1} parent=11 // pred_check_branch
        %139 = sbr.rel (%p137) target = $region20
      $region19: #{patch_embed.1} parent=11 // pred_region
        _
      $region20: #{patch_embed.1} parent=11 // pred_fallthru
        _
    $region12: #{patch_embed.1} parent=5 // pred_fallthru
      _
    %p140 = scmp.lt.s32.totalorder %s9, 2
    // Predicated region
    $region21: #{patch_embed.1} parent=5 // pred_check
      %p141 = pneg %p140
    $region22: #{patch_embed.1} parent=5 // pred_check_branch
      %143 = sbr.rel (%p141) target = $region24
    $region23: #{patch_embed.1} parent=5 // pred_region
      // Predicated region
      $region25: #{patch_embed.1} parent=23 // pred_check
        %p144 = pneg %p43
      $region26: #{patch_embed.1} parent=23 // pred_check_branch
        %146 = sbr.rel (%p144) target = $region28
      $region27: #{patch_embed.1} parent=23 // pred_region
        %p147 = scmp.lt.s32.totalorder %s16, 1
        %s148 = scalar_select %p147, %s16, 1
        %p149 = scmp.lt.s32.totalorder %s17, 0
        %s150 = scalar_select %p149, %s17, 0
        %s151 = smul.addr %s148, 8
        %s152 = sadd.s32 %s150, %s151
        %s153 = smul.addr %s152, 4
        %s154 = scalar_lea.vmem %s0, %s153
      $region28: #{patch_embed.1} parent=23 // pred_fallthru
        _
    $region24: #{patch_embed.1} parent=5 // pred_fallthru
      _
    %p155 = scmp.le.s32.totalorder 1, %s9
    %p156 = scmp.lt.s32.totalorder %s9, 3
    %p157 = pnand %p155, %p156
    %p158 = pneg %p157
    // Predicated region
    $region29: #{patch_embed.1} parent=5 // pred_check
      _
    $region30: #{patch_embed.1} parent=5 // pred_check_branch
      %160 = sbr.rel (%p157) target = $region32
    $region31: #{patch_embed.1} parent=5 // pred_region
      %s161 = ssub.s32 %s9, 1
      %p162 = scmp.lt.s32.totalorder %s18, 1
      %s163 = scalar_select %p162, %s18, 1
      %p164 = scmp.lt.s32.totalorder %s19, 0
      %s165 = scalar_select %p164, %s19, 0
      %s166 = smul.addr %s163, 8
      %s167 = sadd.s32 %s165, %s166
      %s168 = smul.addr %s167, 4
      %s169 = scalar_lea.vmem %s0, %s168
      %p170 = pneg %p49
      %p171 = pneg %p46
      %p172 = pneg %p70
      %p173 = pneg %p67
      %p174 = pneg %p91
      %p175 = pneg %p88
      %p176 = pneg %p119
      %p177 = pneg %p116
      %p178 = scmp.lt.s32.totalorder %s18, 1
      %s179 = scalar_select %p178, %s18, 1
      %p180 = scmp.lt.s32.totalorder %s19, 0
      %s181 = scalar_select %p180, %s19, 0
      %s182 = smul.addr %s179, 4
      %s183 = sadd.s32 %s181, %s182
      %s184 = smul.addr %s183, 8
      %s185 = scalar_lea.vmem %s3, %s184
      %p186 = scmp.lt.s32.totalorder %s18, 1
      %s187 = scalar_select %p186, %s18, 1
      %p188 = scmp.lt.s32.totalorder %s19, 0
      %s189 = scalar_select %p188, %s19, 0
      %s190 = smul.addr %s187, 8
      %s191 = sadd.s32 %s189, %s190
      %s192 = smul.addr %s191, 4
      %s193 = scalar_lea.vmem %s0, %s192
      %p194 = scmp.lt.s32.totalorder %s18, 1
      %s195 = scalar_select %p194, %s18, 1
      %p196 = scmp.lt.s32.totalorder %s19, 0
      %s197 = scalar_select %p196, %s19, 0
      %s198 = smul.addr %s195, 4
      %s199 = sadd.s32 %s197, %s198
      %s200 = smul.addr %s199, 8
      %s201 = scalar_lea.vmem %s3, %s200
      %v203 = vld [vmem:[%s1] sm:$0xf]
      %v204 = vld [vmem:[%s1 + $0x4] sm:$0xf]
      %v205 = vld [vmem:[%s1 + $0x8] sm:$0xf]
      %v206 = vld [vmem:[%s1 + $0xc] sm:$0xf]
      %v207 = vld [vmem:[%s193] sm:$0xf]
      %v208 = vld [vmem:[%s193 + $0x4] sm:$0xf]
      %v209 = vld [vmem:[%s193 + $0x8] sm:$0xf]
      %v210 = vld [vmem:[%s193 + $0xc] sm:$0xf]
      %v211 = vld [vmem:[%s193 + $0x10] sm:$0xf]
      %v212 = vld [vmem:[%s193 + $0x14] sm:$0xf]
      %v213 = vld [vmem:[%s193 + $0x18] sm:$0xf]
      %v214 = vld [vmem:[%s193 + $0x1c] sm:$0xf]
      %v215 = vld [vmem:[%s2] sm:$0xff]
      %v216 = vld [vmem:[%s2 + $0x8] sm:$0xff]
      %v217 = vld [vmem:[%s2 + $0x10] sm:$0xff]
      %v218 = vld [vmem:[%s2 + $0x18] sm:$0xff]
      %220 = vset.pattern.permute.xlu0 0
      %221 = vperm.xlu0 %220, %v215
      %v222 = vpop.permute.xlu0 %221
      %225 = vset.pattern.permute.xlu0 0
      %226 = vperm.xlu0 %225, %v216
      %v227 = vpop.permute.xlu0 %226
      %230 = vset.pattern.permute.xlu0 0
      %231 = vperm.xlu0 %230, %v217
      %v232 = vpop.permute.xlu0 %231
      %235 = vset.pattern.permute.xlu0 0
      %236 = vperm.xlu0 %235, %v218
      %v237 = vpop.permute.xlu0 %236
      %v243 = vunpack.c.l.b16 %v203
      %v244 = vunpack.c.l.b16 %v204
      %v245 = vunpack.c.l.b16 %v205
      %v246 = vunpack.c.l.b16 %v206
      %v247 = vpack.c.b16 %v244, %v243
      %v248 = vpack.c.b16 %v246, %v245
      %v257 = vunpack.c.l.b16 %v207
      %v258 = vunpack.c.l.b16 %v208
      %v259 = vunpack.c.l.b16 %v209
      %v260 = vunpack.c.l.b16 %v210
      %v261 = vunpack.c.l.b16 %v211
      %v262 = vunpack.c.l.b16 %v212
      %v263 = vunpack.c.l.b16 %v213
      %v264 = vunpack.c.l.b16 %v214
      %v265 = vpack.c.b16 %v258, %v257
      %v266 = vpack.c.b16 %v260, %v259
      %v267 = vpack.c.b16 %v262, %v261
      %v268 = vpack.c.b16 %v264, %v263
      %vm273 = vcmask 523264
      %v275 = vsel %vm273, %v247, 0
      %v278 = vsel %vm273, %v248, 0
      %280 = vmatprep.subr.bf16.mxu0 0
      %281 = vmatpush1.bf16.msra.mxu0 %v265
      %282 = vmatprep.subr.bf16.mxu0 0
      %283 = vmatpush1.bf16.msra.mxu0 %v266
      %284 = vmatprep.subr.bf16.mxu0 0
      %285 = vmatpush1.bf16.msra.mxu0 %v267
      %286 = vmatprep.subr.bf16.mxu0 0
      %287 = vmatpush1.bf16.msra.mxu0 %v268
      %288 = vmatprep.subr.bf16.mxu0 0
      %289 = vmatpush1.bf16.msra.mxu0 0
      %290 = vmatprep.subr.bf16.mxu0 0
      %291 = vmatpush1.bf16.msra.mxu0 0
      %292 = vmatprep.subr.bf16.mxu0 0
      %293 = vmatpush1.bf16.msra.mxu0 0
      %294 = vmatprep.subr.bf16.mxu0 0
      %295 = vmatpush1.bf16.msra.mxu0 0
      %296 = vmatprep.subr.bf16.mxu0 0
      %297 = vmatpush1.bf16.msra.mxu0 0
      %298 = vmatprep.subr.bf16.mxu0 0
      %299 = vmatpush1.bf16.msra.mxu0 0
      %300 = vmatprep.subr.bf16.mxu0 0
      %301 = vmatpush1.bf16.msra.mxu0 0
      %302 = vmatprep.subr.bf16.mxu0 0
      %303 = vmatpush1.bf16.msra.mxu0 0
      %304 = vmatprep.subr.bf16.mxu0 0
      %305 = vmatpush1.bf16.msra.mxu0 0
      %306 = vmatprep.subr.bf16.mxu0 0
      %307 = vmatpush1.bf16.msra.mxu0 0
      %308 = vmatprep.subr.bf16.mxu0 0
      %309 = vmatpush1.bf16.msra.mxu0 0
      %310 = vmatprep.subr.bf16.mxu0 0
      %311 = vmatpush1.bf16.msra.mxu0 0
      %312 = vmatprep.mubr.bf16.mxu0 0
      %313 = vmatmul.mubr.bf16.gmra.mrb[0].mxu0 %v275
      %v314 = vpop.f32.mrb[0].mxu0
      %v315 = vadd.f32 %v222, %v314
      %v316 = vpop.f32.mrb[0].mxu0
      %v317 = vpop.f32.mrb[0].mxu0
      %v318 = vadd.f32 %v227, %v317
      %v319 = vpop.f32.mrb[0].mxu0
      %320 = vmatprep.mubr.bf16.mxu0 0
      %321 = vmatmul.mubr.bf16.gmra.mrb[0].mxu0 %v278
      %v322 = vpop.f32.mrb[0].mxu0
      %v323 = vadd.f32 %v232, %v322
      %v324 = vpop.f32.mrb[0].mxu0
      %v325 = vpop.f32.mrb[0].mxu0
      %v326 = vadd.f32 %v237, %v325
      %v327 = vpop.f32.mrb[0].mxu0
      %328 = vdwg.mxu0
      %vm329 = vcmask 130048
      %330 = vst.msk [vmem:[%s201] sm:$0xff] %vm329, %v315
      %331 = vst.msk [vmem:[%s201 + $0x8] sm:$0xff] %vm329, %v318
      %332 = vst.msk [vmem:[%s201 + $0x10] sm:$0xff] %vm329, %v323
      %333 = vst.msk [vmem:[%s201 + $0x18] sm:$0xff] %vm329, %v326
      %p334 = scmp.lt.s32.totalorder %s18, 1
      %s335 = scalar_select %p334, %s18, 1
      %p336 = scmp.lt.s32.totalorder %s19, 0
      %s337 = scalar_select %p336, %s19, 0
      %s338 = smul.addr %s335, 4
      %s339 = sadd.s32 %s337, %s338
      %s340 = smul.addr %s339, 8
      %s341 = scalar_lea.vmem %s3, %s340
      // Predicated region
      $region33: #{patch_embed.1} parent=31 // pred_check
        %p342 = pneg %p116
      $region34: #{patch_embed.1} parent=31 // pred_check_branch
        %344 = sbr.rel (%p342) target = $region36
      $region35: #{patch_embed.1} parent=31 // pred_region
        _
      $region36: #{patch_embed.1} parent=31 // pred_fallthru
        _
    $region32: #{patch_embed.1} parent=5 // pred_fallthru
      _
    %p345 = scmp.le.s32.totalorder 2, %s9
    // Predicated region
    $region37: #{patch_embed.1} parent=5 // pred_check
      %p346 = pneg %p345
    $region38: #{patch_embed.1} parent=5 // pred_check_branch
      %348 = sbr.rel (%p346) target = $region40
    $region39: #{patch_embed.1} parent=5 // pred_region
      %s349 = ssub.s32 %s9, 2
      // Predicated region
      $region41: #{patch_embed.1} parent=39 // pred_check
        %p350 = pneg %p122
      $region42: #{patch_embed.1} parent=39 // pred_check_branch
        %352 = sbr.rel (%p350) target = $region44
      $region43: #{patch_embed.1} parent=39 // pred_region
        %p353 = scmp.lt.s32.totalorder %s20, 1
        %s354 = scalar_select %p353, %s20, 1
        %p355 = scmp.lt.s32.totalorder %s21, 0
        %s356 = scalar_select %p355, %s21, 0
        %s357 = smul.addr %s354, 4
        %s358 = sadd.s32 %s356, %s357
        %s359 = smul.addr %s358, 8
        %s360 = scalar_lea.vmem %s3, %s359
      $region44: #{patch_embed.1} parent=39 // pred_fallthru
        _
    $region40: #{patch_embed.1} parent=5 // pred_fallthru
      _
  $region6: #{patch_embed.1} parent=0 // loop_footer
    %s13 = sadd.s32 1, %s9
  $region7: #{patch_embed.1} parent=0 // loop_footer_branch
    %8 = sbr.rel target = $region3
  $region8: #{patch_embed.1} parent=0 // loop_exit
    _

</llo_original>
